<compile_context>
chip_gen: v6e
topology: v6e:2x2x1
jax: 0.10.0
libtpu: 0.0.40
codegen_flags: <defaults>
</compile_context>

<pallas_src>
import jax
import jax.numpy as jnp
from jax.experimental import pallas as pl
from jax.experimental.pallas import tpu as pltpu

LANE = 128

W_ORDER = ("att_w1", "att_w2", "feat_w", "enc_w1", "enc_w2", "dec_w1", "dec_w2")
B_ORDER = ("att_b1", "att_b2", "feat_b", "enc_b1", "enc_b2", "dec_b1", "dec_b2")


def _round_up(n, m=LANE):
    return ((n + m - 1) // m) * m


def _pad2(x, rows, cols):
    return jnp.pad(x, ((0, rows - x.shape[0]), (0, cols - x.shape[1])))


# ----------------------------------------------------------------------------
# Fused kernel: embedding gather (tfidf-scaled one-hot @ table on the MXU) +
# attention gate + mean-pool-as-matmul + feature FC, plus encoder and decoder
# MLPs.  All feature dims are lane-padded to a common Dp (=128 here).
#
#   w_ref : (7, Dp, Dp)  stacked weights, order = W_ORDER
#   b_ref : (8, Dp)      stacked biases,  order = B_ORDER (+ one zero pad row)
#   out   : (B, 3*Dp)    [x_hidden | y_hidden | y_predicted]
# ----------------------------------------------------------------------------
def fused_kernel(bow_ref, tfidf_ref, labels_ref, pool_ref, emb_ref,
                 w_ref, b_ref, out_ref):
    Dp = w_ref.shape[2]
    bow = bow_ref[...]                                   # (BL, 1) int32
    BL = bow.shape[0]
    Vp = emb_ref.shape[0]

    # ---------------- FeatureEmbedding ----------------
    # Embedding lookup as a one-hot matmul with tfidf folded into the one-hot:
    # row r holds tfidf[r] at column bow[r] (exact: scaling rows of a 0/1 matrix
    # before the MXU matmul).  bow < vocab <= Vp, and padded emb rows are zero.
    vocab_iota = jax.lax.broadcasted_iota(jnp.int32, (BL, Vp), 1)
    onehot = jnp.where(bow == vocab_iota, tfidf_ref[...], 0.0)       # (BL, Vp)
    we = jnp.dot(onehot, emb_ref[...],
                 preferred_element_type=jnp.float32)                 # (BL, Dp)

    a = jnp.dot(we, w_ref[0], preferred_element_type=jnp.float32) + b_ref[0:1, :]
    a = jnp.maximum(a, 0.0)                                          # relu
    a = jnp.dot(a, w_ref[1], preferred_element_type=jnp.float32) + b_ref[1:2, :]
    a = jax.nn.sigmoid(a)                                            # attention gate
    gated = a * we      # padded lanes of `a` are sigmoid(0)=0.5 but we==0 there

    # mean over L as a matmul with the precomputed (B, BL) pooling matrix.
    # TODO(synk): at production B/L, grid over B and do a sublane reduce per
    # tile instead of this O(B^2*L) pool matmul.
    pooled = jnp.dot(pool_ref[...], gated,
                     preferred_element_type=jnp.float32)             # (B, Dp)

    xh = jnp.dot(pooled, w_ref[2], preferred_element_type=jnp.float32) + b_ref[2:3, :]
    xh = jnp.maximum(xh, 0.0)

    # ---------------- Encoder ----------------
    h = jnp.dot(labels_ref[...], w_ref[3],
                preferred_element_type=jnp.float32) + b_ref[3:4, :]
    h = jnp.maximum(h, 0.0)
    yh = jnp.dot(h, w_ref[4], preferred_element_type=jnp.float32) + b_ref[4:5, :]
    yh = jnp.maximum(yh, 0.0)

    # ---------------- Decoder ----------------
    d = jnp.dot(yh, w_ref[5], preferred_element_type=jnp.float32) + b_ref[5:6, :]
    d = jnp.maximum(d, 0.0)
    yp = jax.nn.sigmoid(
        jnp.dot(d, w_ref[6], preferred_element_type=jnp.float32) + b_ref[6:7, :])

    # Single lane-dense writeback: [xh | yh | yp]; split wrapper-side.
    out_ref[:, 0 * Dp:1 * Dp] = xh
    out_ref[:, 1 * Dp:2 * Dp] = yh
    out_ref[:, 2 * Dp:3 * Dp] = yp


# ----------------------------------------------------------------------------
# Param prep: one-time zero-padding of every weight / bias to a common lane-
# dense dim Dp (=128) and stacking into two slabs.  Zero padding is exact:
# padded input lanes are zero, padded weight rows contribute nothing, padded
# weight columns + zero bias give relu(0)=0 feeding zero rows downstream, and
# the sigmoid(0)=0.5 padded lanes of `a` / yp are multiplied by zero or sliced
# off in the wrapper.
# ----------------------------------------------------------------------------
def pack_params(p):
    vocab, E = p["emb"].shape
    A = p["att_w1"].shape[1]
    Enc = p["enc_w1"].shape[1]
    H = p["feat_w"].shape[1]
    O = p["dec_w2"].shape[1]
    Dp = max(_round_up(d) for d in (E, A, Enc, H, O))
    Vp = _round_up(vocab)

    emb_p = _pad2(p["emb"], Vp, Dp)                                   # (Vp, Dp)
    w_slab = jnp.stack([_pad2(p[k], Dp, Dp) for k in W_ORDER])        # (7, Dp, Dp)
    b_slab = jnp.concatenate(
        [_pad2(p[k], 1, Dp) for k in B_ORDER]
        + [jnp.zeros((1, Dp), jnp.float32)], axis=0)                  # (8, Dp)
    return {"emb": emb_p, "w": w_slab, "b": b_slab}


def attention_model_forward(bow, tfidf, labels, packed, H, O):
    """Full AttentionModel.forward: returns (x_hidden, y_hidden, y_predicted)."""
    B, L = bow.shape
    BL = B * L
    Dp = packed["w"].shape[-1]

    # Wrapper-side layout plumbing (free): flatten / lane-pad before the kernel.
    bow2 = bow.reshape(BL, 1).astype(jnp.int32)
    tfidf2 = tfidf.reshape(BL, 1).astype(jnp.float32)
    labels_p = _pad2(labels.astype(jnp.float32), B, Dp)

    # Pooling matrix for the mean over L: pool[b, b*L + l] = 1/L.
    pool = jnp.kron(jnp.eye(B, dtype=jnp.float32),
                    jnp.full((1, L), 1.0 / L, dtype=jnp.float32))

    vmem = pl.BlockSpec(memory_space=pltpu.MemorySpace.VMEM)
    out = pl.pallas_call(
        fused_kernel,
        out_shape=jax.ShapeDtypeStruct((B, 3 * Dp), jnp.float32),
        in_specs=[vmem] * 7,
        out_specs=vmem,
        # Everything is VMEM-resident; budget explicitly (re-derive per gen /
        # once the embedding table and weights grow).
        compiler_params=pltpu.CompilerParams(vmem_limit_bytes=32 << 20),
    )(bow2, tfidf2, labels_p, pool, packed["emb"], packed["w"], packed["b"])

    # Slice the lane padding back off (see padding invariant at top of file).
    xh = out[:, 0 * Dp:0 * Dp + H]
    yh = out[:, 1 * Dp:1 * Dp + H]
    yp = out[:, 2 * Dp:2 * Dp + O]
    return xh, yh, yp


def _reference_forward(bow, tfidf, labels, p):
    """Pure-JAX reference for correctness check (unpadded params)."""
    we = jnp.take(p["emb"], bow, axis=0) * tfidf
    a = jax.nn.relu(we @ p["att_w1"] + p["att_b1"])
    a = jax.nn.sigmoid(a @ p["att_w2"] + p["att_b2"])
    pooled = jnp.mean(a * we, axis=1)
    xh = jax.nn.relu(pooled @ p["feat_w"] + p["feat_b"])
    h = jax.nn.relu(labels @ p["enc_w1"] + p["enc_b1"])
    yh = jax.nn.relu(h @ p["enc_w2"] + p["enc_b2"])
    d = jax.nn.relu(yh @ p["dec_w1"] + p["dec_b1"])
    yp = jax.nn.sigmoid(d @ p["dec_w2"] + p["dec_b2"])
    return xh, yh, yp


def init_params(key, vocab, E, A, Enc, H, O):
    ks = jax.random.split(key, 16)

    def lin(kw, kb, fan_in, fan_out):
        bound = 1.0 / jnp.sqrt(fan_in)
        w = jax.random.uniform(kw, (fan_in, fan_out), jnp.float32, -bound, bound)
        b = jax.random.uniform(kb, (1, fan_out), jnp.float32, -bound, bound)
        return w, b

    p = {}
    p["emb"] = jax.random.normal(ks[0], (vocab, E), jnp.float32)
    p["att_w1"], p["att_b1"] = lin(ks[1], ks[2], E, A)
    p["att_w2"], p["att_b2"] = lin(ks[3], ks[4], A, E)
    p["feat_w"], p["feat_b"] = lin(ks[5], ks[6], E, H)
    p["enc_w1"], p["enc_b1"] = lin(ks[7], ks[8], O, Enc)
    p["enc_w2"], p["enc_b2"] = lin(ks[9], ks[10], Enc, H)
    p["dec_w1"], p["dec_b1"] = lin(ks[11], ks[12], H, Enc)
    p["dec_w2"], p["dec_b2"] = lin(ks[13], ks[14], Enc, O)
    return p


if __name__ == "__main__":
    # Small deterministic shapes.
    B, L = 2, 8            # batch, sequence (num words)
    vocab = 64             # input_size (embedding rows)
    E = 32                 # embedding_size
    A = 16                 # attention_layer_size
    Enc = 24               # encoder_layer_size
    H = 32                 # hidden_layer_size
    O = 8                  # output_size (num labels)

    key = jax.random.PRNGKey(0)
    kp, kb, kt, kl = jax.random.split(key, 4)

    params = init_params(kp, vocab, E, A, Enc, H, O)
    packed = pack_params(params)

    bow = jax.random.randint(kb, (B, L), 0, vocab, dtype=jnp.int32)
    tfidf = jax.random.uniform(kt, (B, L, 1), jnp.float32)
    labels = (jax.random.uniform(kl, (B, O), jnp.float32) > 0.5).astype(jnp.float32)

    xh, yh, yp = jax.block_until_ready(
        attention_model_forward(bow, tfidf, labels, packed, H, O))

    xh_r, yh_r, yp_r = _reference_forward(bow, tfidf, labels, params)
    assert jnp.allclose(xh, xh_r, atol=1e-5), "x_hidden mismatch"
    assert jnp.allclose(yh, yh_r, atol=1e-5), "y_hidden mismatch"
    assert jnp.allclose(yp, yp_r, atol=1e-5), "y_predicted mismatch"

    print("KERNEL_OK")
</pallas_src>

<mosaic_0001>
module attributes {stable_mosaic.version = 11 : i64} {
  func.func @fused_kernel(%arg0: memref<16x1xi32, #tpu.memory_space<vmem>>, %arg1: memref<16x1xf32, #tpu.memory_space<vmem>>, %arg2: memref<2x128xf32, #tpu.memory_space<vmem>>, %arg3: memref<2x16xf32, #tpu.memory_space<vmem>>, %arg4: memref<128x128xf32, #tpu.memory_space<vmem>>, %arg5: memref<7x128x128xf32, #tpu.memory_space<vmem>>, %arg6: memref<8x128xf32, #tpu.memory_space<vmem>>, %arg7: memref<2x384xf32, #tpu.memory_space<vmem>>) attributes {dimension_semantics = [], scalar_prefetch = 0 : i64, scratch_operands = 0 : i64, tpu.core_type = #tpu.core_type<tc>} {
    %c0 = arith.constant 0 : index
    %c0_0 = arith.constant 0 : index
    %0 = vector.load %arg0[%c0, %c0_0] : memref<16x1xi32, #tpu.memory_space<vmem>>, vector<16x1xi32>
    %1 = tpu.iota {dimensions = array<i32: 1>} : vector<16x128xi32>
    %2 = vector.broadcast %0 : vector<16x1xi32> to vector<16x128xi32>
    %3 = arith.cmpi eq, %2, %1 : vector<16x128xi32>
    %c0_1 = arith.constant 0 : index
    %c0_2 = arith.constant 0 : index
    %4 = vector.load %arg1[%c0_1, %c0_2] : memref<16x1xf32, #tpu.memory_space<vmem>>, vector<16x1xf32>
    %cst = arith.constant 0.000000e+00 : f32
    %5 = vector.shape_cast %4 : vector<16x1xf32> to vector<16x1xf32>
    %6 = vector.broadcast %5 : vector<16x1xf32> to vector<16x128xf32>
    %7 = vector.broadcast %cst : f32 to vector<16x128xf32>
    %8 = arith.select %3, %6, %7 : vector<16x128xi1>, vector<16x128xf32>
    %c0_3 = arith.constant 0 : index
    %c0_4 = arith.constant 0 : index
    %9 = vector.load %arg4[%c0_3, %c0_4] : memref<128x128xf32, #tpu.memory_space<vmem>>, vector<128x128xf32>
    %cst_5 = arith.constant dense<0.000000e+00> : vector<16x128xf32>
    %10 = tpu.matmul %8, %9, %cst_5 {dimension_numbers = #tpu.dot_dimension_numbers<[1], [0], [0], [1], [0, 0, 1, 1], [], []>} : vector<16x128xf32>, vector<128x128xf32>, vector<16x128xf32> -> vector<16x128xf32>
    %c0_6 = arith.constant 0 : index
    %c0_7 = arith.constant 0 : index
    %c0_8 = arith.constant 0 : index
    %11 = vector.load %arg5[%c0_6, %c0_7, %c0_8] : memref<7x128x128xf32, #tpu.memory_space<vmem>>, vector<1x128x128xf32>
    %12 = vector.shape_cast %11 : vector<1x128x128xf32> to vector<128x128xf32>
    %cst_9 = arith.constant dense<0.000000e+00> : vector<16x128xf32>
    %13 = tpu.matmul %10, %12, %cst_9 {dimension_numbers = #tpu.dot_dimension_numbers<[1], [0], [0], [1], [0, 0, 1, 1], [], []>} : vector<16x128xf32>, vector<128x128xf32>, vector<16x128xf32> -> vector<16x128xf32>
    %c0_10 = arith.constant 0 : index
    %c0_11 = arith.constant 0 : index
    %14 = vector.load %arg6[%c0_10, %c0_11] : memref<8x128xf32, #tpu.memory_space<vmem>>, vector<1x128xf32>
    %15 = vector.broadcast %14 : vector<1x128xf32> to vector<16x128xf32>
    %16 = arith.addf %13, %15 : vector<16x128xf32>
    %cst_12 = arith.constant 0.000000e+00 : f32
    %17 = vector.broadcast %cst_12 : f32 to vector<16x128xf32>
    %18 = arith.maximumf %16, %17 : vector<16x128xf32>
    %c1 = arith.constant 1 : index
    %c0_13 = arith.constant 0 : index
    %c0_14 = arith.constant 0 : index
    %19 = vector.load %arg5[%c1, %c0_13, %c0_14] : memref<7x128x128xf32, #tpu.memory_space<vmem>>, vector<1x128x128xf32>
    %20 = vector.shape_cast %19 : vector<1x128x128xf32> to vector<128x128xf32>
    %cst_15 = arith.constant dense<0.000000e+00> : vector<16x128xf32>
    %21 = tpu.matmul %18, %20, %cst_15 {dimension_numbers = #tpu.dot_dimension_numbers<[1], [0], [0], [1], [0, 0, 1, 1], [], []>} : vector<16x128xf32>, vector<128x128xf32>, vector<16x128xf32> -> vector<16x128xf32>
    %c1_16 = arith.constant 1 : index
    %c0_17 = arith.constant 0 : index
    %22 = vector.load %arg6[%c1_16, %c0_17] : memref<8x128xf32, #tpu.memory_space<vmem>>, vector<1x128xf32>
    %23 = vector.broadcast %22 : vector<1x128xf32> to vector<16x128xf32>
    %24 = arith.addf %21, %23 : vector<16x128xf32>
    %25 = arith.negf %24 : vector<16x128xf32>
    %26 = math.exp %25 : vector<16x128xf32>
    %cst_18 = arith.constant 1.000000e+00 : f32
    %27 = vector.broadcast %cst_18 : f32 to vector<16x128xf32>
    %28 = arith.addf %27, %26 : vector<16x128xf32>
    %29 = arith.divf %27, %28 : vector<16x128xf32>
    %30 = arith.mulf %29, %10 : vector<16x128xf32>
    %c0_19 = arith.constant 0 : index
    %c0_20 = arith.constant 0 : index
    %31 = vector.load %arg3[%c0_19, %c0_20] : memref<2x16xf32, #tpu.memory_space<vmem>>, vector<2x16xf32>
    %cst_21 = arith.constant dense<0.000000e+00> : vector<2x128xf32>
    %32 = tpu.matmul %31, %30, %cst_21 {dimension_numbers = #tpu.dot_dimension_numbers<[1], [0], [0], [1], [0, 0, 1, 1], [], []>} : vector<2x16xf32>, vector<16x128xf32>, vector<2x128xf32> -> vector<2x128xf32>
    %c2 = arith.constant 2 : index
    %c0_22 = arith.constant 0 : index
    %c0_23 = arith.constant 0 : index
    %33 = vector.load %arg5[%c2, %c0_22, %c0_23] : memref<7x128x128xf32, #tpu.memory_space<vmem>>, vector<1x128x128xf32>
    %34 = vector.shape_cast %33 : vector<1x128x128xf32> to vector<128x128xf32>
    %cst_24 = arith.constant dense<0.000000e+00> : vector<2x128xf32>
    %35 = tpu.matmul %32, %34, %cst_24 {dimension_numbers = #tpu.dot_dimension_numbers<[1], [0], [0], [1], [0, 0, 1, 1], [], []>} : vector<2x128xf32>, vector<128x128xf32>, vector<2x128xf32> -> vector<2x128xf32>
    %c2_25 = arith.constant 2 : index
    %c0_26 = arith.constant 0 : index
    %36 = vector.load %arg6[%c2_25, %c0_26] : memref<8x128xf32, #tpu.memory_space<vmem>>, vector<1x128xf32>
    %37 = vector.broadcast %36 : vector<1x128xf32> to vector<2x128xf32>
    %38 = arith.addf %35, %37 : vector<2x128xf32>
    %cst_27 = arith.constant 0.000000e+00 : f32
    %39 = vector.broadcast %cst_27 : f32 to vector<2x128xf32>
    %40 = arith.maximumf %38, %39 : vector<2x128xf32>
    %c0_28 = arith.constant 0 : index
    %c0_29 = arith.constant 0 : index
    %41 = vector.load %arg2[%c0_28, %c0_29] : memref<2x128xf32, #tpu.memory_space<vmem>>, vector<2x128xf32>
    %c3 = arith.constant 3 : index
    %c0_30 = arith.constant 0 : index
    %c0_31 = arith.constant 0 : index
    %42 = vector.load %arg5[%c3, %c0_30, %c0_31] : memref<7x128x128xf32, #tpu.memory_space<vmem>>, vector<1x128x128xf32>
    %43 = vector.shape_cast %42 : vector<1x128x128xf32> to vector<128x128xf32>
    %cst_32 = arith.constant dense<0.000000e+00> : vector<2x128xf32>
    %44 = tpu.matmul %41, %43, %cst_32 {dimension_numbers = #tpu.dot_dimension_numbers<[1], [0], [0], [1], [0, 0, 1, 1], [], []>} : vector<2x128xf32>, vector<128x128xf32>, vector<2x128xf32> -> vector<2x128xf32>
    %c3_33 = arith.constant 3 : index
    %c0_34 = arith.constant 0 : index
    %45 = vector.load %arg6[%c3_33, %c0_34] : memref<8x128xf32, #tpu.memory_space<vmem>>, vector<1x128xf32>
    %46 = vector.broadcast %45 : vector<1x128xf32> to vector<2x128xf32>
    %47 = arith.addf %44, %46 : vector<2x128xf32>
    %cst_35 = arith.constant 0.000000e+00 : f32
    %48 = vector.broadcast %cst_35 : f32 to vector<2x128xf32>
    %49 = arith.maximumf %47, %48 : vector<2x128xf32>
    %c4 = arith.constant 4 : index
    %c0_36 = arith.constant 0 : index
    %c0_37 = arith.constant 0 : index
    %50 = vector.load %arg5[%c4, %c0_36, %c0_37] : memref<7x128x128xf32, #tpu.memory_space<vmem>>, vector<1x128x128xf32>
    %51 = vector.shape_cast %50 : vector<1x128x128xf32> to vector<128x128xf32>
    %cst_38 = arith.constant dense<0.000000e+00> : vector<2x128xf32>
    %52 = tpu.matmul %49, %51, %cst_38 {dimension_numbers = #tpu.dot_dimension_numbers<[1], [0], [0], [1], [0, 0, 1, 1], [], []>} : vector<2x128xf32>, vector<128x128xf32>, vector<2x128xf32> -> vector<2x128xf32>
    %c4_39 = arith.constant 4 : index
    %c0_40 = arith.constant 0 : index
    %53 = vector.load %arg6[%c4_39, %c0_40] : memref<8x128xf32, #tpu.memory_space<vmem>>, vector<1x128xf32>
    %54 = vector.broadcast %53 : vector<1x128xf32> to vector<2x128xf32>
    %55 = arith.addf %52, %54 : vector<2x128xf32>
    %cst_41 = arith.constant 0.000000e+00 : f32
    %56 = vector.broadcast %cst_41 : f32 to vector<2x128xf32>
    %57 = arith.maximumf %55, %56 : vector<2x128xf32>
    %c5 = arith.constant 5 : index
    %c0_42 = arith.constant 0 : index
    %c0_43 = arith.constant 0 : index
    %58 = vector.load %arg5[%c5, %c0_42, %c0_43] : memref<7x128x128xf32, #tpu.memory_space<vmem>>, vector<1x128x128xf32>
    %59 = vector.shape_cast %58 : vector<1x128x128xf32> to vector<128x128xf32>
    %cst_44 = arith.constant dense<0.000000e+00> : vector<2x128xf32>
    %60 = tpu.matmul %57, %59, %cst_44 {dimension_numbers = #tpu.dot_dimension_numbers<[1], [0], [0], [1], [0, 0, 1, 1], [], []>} : vector<2x128xf32>, vector<128x128xf32>, vector<2x128xf32> -> vector<2x128xf32>
    %c5_45 = arith.constant 5 : index
    %c0_46 = arith.constant 0 : index
    %61 = vector.load %arg6[%c5_45, %c0_46] : memref<8x128xf32, #tpu.memory_space<vmem>>, vector<1x128xf32>
    %62 = vector.broadcast %61 : vector<1x128xf32> to vector<2x128xf32>
    %63 = arith.addf %60, %62 : vector<2x128xf32>
    %cst_47 = arith.constant 0.000000e+00 : f32
    %64 = vector.broadcast %cst_47 : f32 to vector<2x128xf32>
    %65 = arith.maximumf %63, %64 : vector<2x128xf32>
    %c6 = arith.constant 6 : index
    %c0_48 = arith.constant 0 : index
    %c0_49 = arith.constant 0 : index
    %66 = vector.load %arg5[%c6, %c0_48, %c0_49] : memref<7x128x128xf32, #tpu.memory_space<vmem>>, vector<1x128x128xf32>
    %67 = vector.shape_cast %66 : vector<1x128x128xf32> to vector<128x128xf32>
    %cst_50 = arith.constant dense<0.000000e+00> : vector<2x128xf32>
    %68 = tpu.matmul %65, %67, %cst_50 {dimension_numbers = #tpu.dot_dimension_numbers<[1], [0], [0], [1], [0, 0, 1, 1], [], []>} : vector<2x128xf32>, vector<128x128xf32>, vector<2x128xf32> -> vector<2x128xf32>
    %c6_51 = arith.constant 6 : index
    %c0_52 = arith.constant 0 : index
    %69 = vector.load %arg6[%c6_51, %c0_52] : memref<8x128xf32, #tpu.memory_space<vmem>>, vector<1x128xf32>
    %70 = vector.broadcast %69 : vector<1x128xf32> to vector<2x128xf32>
    %71 = arith.addf %68, %70 : vector<2x128xf32>
    %72 = arith.negf %71 : vector<2x128xf32>
    %73 = math.exp %72 : vector<2x128xf32>
    %cst_53 = arith.constant 1.000000e+00 : f32
    %74 = vector.broadcast %cst_53 : f32 to vector<2x128xf32>
    %75 = arith.addf %74, %73 : vector<2x128xf32>
    %76 = arith.divf %74, %75 : vector<2x128xf32>
    %c0_54 = arith.constant 0 : index
    %c0_55 = arith.constant 0 : index
    %77 = vector.load %arg7[%c0_54, %c0_55] : memref<2x384xf32, #tpu.memory_space<vmem>>, vector<2x128xf32>
    tpu.vector_store %arg7[%c0_54, %c0_55], %40 {strides = array<i32>} : memref<2x384xf32, #tpu.memory_space<vmem>>, vector<2x128xf32>,
    %c0_56 = arith.constant 0 : index
    %c128 = arith.constant 128 : index
    %78 = vector.load %arg7[%c0_56, %c128] : memref<2x384xf32, #tpu.memory_space<vmem>>, vector<2x128xf32>
    tpu.vector_store %arg7[%c0_56, %c128], %57 {strides = array<i32>} : memref<2x384xf32, #tpu.memory_space<vmem>>, vector<2x128xf32>,
    %c0_57 = arith.constant 0 : index
    %c256 = arith.constant 256 : index
    %79 = vector.load %arg7[%c0_57, %c256] : memref<2x384xf32, #tpu.memory_space<vmem>>, vector<2x128xf32>
    tpu.vector_store %arg7[%c0_57, %c256], %76 {strides = array<i32>} : memref<2x384xf32, #tpu.memory_space<vmem>>, vector<2x128xf32>,
    return
  }
}

</mosaic_0001>

<llo_original>
// kernel: tpu_custom_call.1
$region0: #{tpu_custom_call.1}
  #allocation0 [shape = 'u32[]', space=smem, size = 0x4, offset = 0x4, fixed_abs, tag = 'smem constant byte address 0x4 - core index']
  #allocation1 [shape = 'u32[144,128]{1,0:T(1,128)}', space=vmem, size = 0x12000, scoped, tag = 'internal scratch']
  %s0 = inlined_call_operand.vmem [shape: s32[16,1], index: 0, kind: input, shape index: {}]
  %s1 = inlined_call_operand.vmem [shape: f32[16,1], index: 1, kind: input, shape index: {}]
  %s2 = inlined_call_operand.vmem [shape: f32[2,128], index: 2, kind: input, shape index: {}]
  %s3 = inlined_call_operand.vmem [shape: f32[2,16], index: 3, kind: input, shape index: {}]
  %s4 = inlined_call_operand.hbm [shape: f32[128,128], index: 4, kind: input, shape index: {}]
  %s5 = inlined_call_operand.hbm [shape: f32[7,128,128], index: 5, kind: input, shape index: {}]
  %s6 = inlined_call_operand.vmem [shape: f32[8,128], index: 6, kind: input, shape index: {}]
  %s7 = inlined_call_operand.hbm [shape: f32[2,384], index: 7, kind: output, shape index: {}]
  %s8 = sld [smem:[#allocation0]]
  $region46: #{tpu_custom_call.1} parent=0
    _
  %s10 = ssub.s32 1, %s8
  %s11 = scalar_select 0, %s10, %s8
  $region1: #{tpu_custom_call.1} parent=0
    #allocation2 [shape = 'u8[65536]{0}', space=vmem, size = 0x10000, scoped, tag = 'input window, operand 4, single buffered']
    #allocation3 [shape = 's32[1]{0}', space=sflag, size = 0x4, scoped, tag = 'scoped memory for tpu_custom_call.1']
    #allocation4 [shape = 's32[1]{0}', space=sflag, size = 0x4, scoped, tag = 'scoped memory for tpu_custom_call.1']
    #allocation5 [shape = 'u8[458752]{0}', space=vmem, size = 0x70000, scoped, tag = 'input window, operand 5, single buffered']
    #allocation6 [shape = 's32[1]{0}', space=sflag, size = 0x4, scoped, tag = 'scoped memory for tpu_custom_call.1']
    #allocation7 [shape = 'u8[3072]{0}', space=vmem, size = 0xc00, scoped, tag = 'output window, operand 0, single buffered']
    %12 = vsyncpa [#allocation3], 0
    %13 = vsyncpa [#allocation6], 0
    %14 = vsyncpa [#allocation4], 0
    // Predicated region
    $region2: #{tpu_custom_call.1} parent=1 // pred_check
      _
    $region3: #{tpu_custom_call.1} parent=1 // pred_check_branch
      %16 = sbr.rel (0) target = $region5
    $region4: #{tpu_custom_call.1} parent=1 // pred_region
      _
    $region5: #{tpu_custom_call.1} parent=1 // pred_fallthru
      _
    // Predicated region
    $region6: #{tpu_custom_call.1} parent=1 // pred_check
      _
    $region7: #{tpu_custom_call.1} parent=1 // pred_check_branch
      %18 = sbr.rel (0) target = $region9
    $region8: #{tpu_custom_call.1} parent=1 // pred_region
      _
    $region9: #{tpu_custom_call.1} parent=1 // pred_fallthru
      _
    // Predicated region
    $region10: #{tpu_custom_call.1} parent=1 // pred_check
      _
    $region11: #{tpu_custom_call.1} parent=1 // pred_check_branch
      %20 = sbr.rel (0) target = $region13
    $region12: #{tpu_custom_call.1} parent=1 // pred_region
      _
    $region13: #{tpu_custom_call.1} parent=1 // pred_fallthru
      _
    // Predicated region
    $region14: #{tpu_custom_call.1} parent=1 // pred_check
      _
    $region15: #{tpu_custom_call.1} parent=1 // pred_check_branch
      %22 = sbr.rel (0) target = $region17
    $region16: #{tpu_custom_call.1} parent=1 // pred_region
      _
    $region17: #{tpu_custom_call.1} parent=1 // pred_fallthru
      _
    // Predicated region
    $region18: #{tpu_custom_call.1} parent=1 // pred_check
      _
    $region19: #{tpu_custom_call.1} parent=1 // pred_check_branch
      %24 = sbr.rel (0) target = $region21
    $region20: #{tpu_custom_call.1} parent=1 // pred_region
      %s26 = ssub.s32 2048, 2048
      %27 = vsyncadd [#allocation3], %s26
      %s28 = sshll.u32 [#allocation2], 4
      %s29 = int_to_ptr.vmem [resolvable:$true] %s28
      %34 = dma.hbm_to_vmem [thread:$0]  %s4, 2048, %s29, [#allocation3], 128, 128, 8
    $region21: #{tpu_custom_call.1} parent=1 // pred_fallthru
      _
    // Predicated region
    $region22: #{tpu_custom_call.1} parent=1 // pred_check
      _
    $region23: #{tpu_custom_call.1} parent=1 // pred_check_branch
      %36 = sbr.rel (0) target = $region25
    $region24: #{tpu_custom_call.1} parent=1 // pred_region
      %s38 = ssub.s32 14336, 14336
      %39 = vsyncadd [#allocation6], %s38
      %s40 = sshll.u32 [#allocation5], 4
      %s41 = int_to_ptr.vmem [resolvable:$true] %s40
      %46 = dma.hbm_to_vmem [thread:$0]  %s5, 14336, %s41, [#allocation6], 128, 128, 8
    $region25: #{tpu_custom_call.1} parent=1 // pred_fallthru
      _
    // Predicated region
    $region26: #{tpu_custom_call.1} parent=1 // pred_check
      _
    $region27: #{tpu_custom_call.1} parent=1 // pred_check_branch
      %48 = sbr.rel (0) target = $region29
    $region28: #{tpu_custom_call.1} parent=1 // pred_region
      _
    $region29: #{tpu_custom_call.1} parent=1 // pred_fallthru
      _
    // Predicated region
    $region30: #{tpu_custom_call.1} parent=1 // pred_check
      _
    $region31: #{tpu_custom_call.1} parent=1 // pred_check_branch
      %50 = sbr.rel (0) target = $region33
    $region32: #{tpu_custom_call.1} parent=1 // pred_region
      %51 = dma.done [#allocation3], 2048
    $region33: #{tpu_custom_call.1} parent=1 // pred_fallthru
      _
    // Predicated region
    $region34: #{tpu_custom_call.1} parent=1 // pred_check
      _
    $region35: #{tpu_custom_call.1} parent=1 // pred_check_branch
      %53 = sbr.rel (0) target = $region37
    $region36: #{tpu_custom_call.1} parent=1 // pred_region
      %54 = dma.done [#allocation6], 14336
    $region37: #{tpu_custom_call.1} parent=1 // pred_fallthru
      _
    %v55 = vld [vmem:[%s0] sm:$0xff]
    %v56 = vld [vmem:[%s0 + $0x8] sm:$0xff]
    %v57 = vlaneseq
    %v58 = vand.u32 %v57, 127
    %59 = vset.pattern.permute.xlu0 0
    %60 = vperm.xlu0 %59, %v55
    %v61 = vpop.permute.xlu0 %60
    %62 = vset.pattern.permute.xlu0 0
    %63 = vperm.xlu0 %62, %v56
    %v64 = vpop.permute.xlu0 %63
    %vm65 = vcmp.eq.s32.totalorder %v61, %v58
    %vm66 = vcmp.eq.s32.totalorder %v64, %v58
    %v67 = vld [vmem:[%s1] sm:$0xff]
    %v68 = vld [vmem:[%s1 + $0x8] sm:$0xff]
    %70 = vset.pattern.permute.xlu0 0
    %71 = vperm.xlu0 %70, %v67
    %v72 = vpop.permute.xlu0 %71
    %75 = vset.pattern.permute.xlu0 0
    %76 = vperm.xlu0 %75, %v68
    %v77 = vpop.permute.xlu0 %76
    %v79 = vsel %vm65, %v72, 0.0
    %v80 = vsel %vm66, %v77, 0.0
    %v81 = vld [vmem:[#allocation2] sm:$0xff]
    %v82 = vld [vmem:[#allocation2 + $0x8] sm:$0xff]
    %v83 = vld [vmem:[#allocation2 + $0x10] sm:$0xff]
    %v84 = vld [vmem:[#allocation2 + $0x18] sm:$0xff]
    %v85 = vld [vmem:[#allocation2 + $0x20] sm:$0xff]
    %v86 = vld [vmem:[#allocation2 + $0x28] sm:$0xff]
    %v87 = vld [vmem:[#allocation2 + $0x30] sm:$0xff]
    %v88 = vld [vmem:[#allocation2 + $0x38] sm:$0xff]
    %v89 = vld [vmem:[#allocation2 + $0x40] sm:$0xff]
    %v90 = vld [vmem:[#allocation2 + $0x48] sm:$0xff]
    %v91 = vld [vmem:[#allocation2 + $0x50] sm:$0xff]
    %v92 = vld [vmem:[#allocation2 + $0x58] sm:$0xff]
    %v93 = vld [vmem:[#allocation2 + $0x60] sm:$0xff]
    %v94 = vld [vmem:[#allocation2 + $0x68] sm:$0xff]
    %v95 = vld [vmem:[#allocation2 + $0x70] sm:$0xff]
    %v96 = vld [vmem:[#allocation2 + $0x78] sm:$0xff]
    %97 = vmatprep.subr.mxu0 0.0
    %98 = vmatpush1.msra.mxu0 %v96
    %99 = vmatprep.subr.mxu0 0.0
    %100 = vmatpush1.msra.mxu0 %v95
    %101 = vmatprep.subr.mxu0 0.0
    %102 = vmatpush1.msra.mxu0 %v94
    %103 = vmatprep.subr.mxu0 0.0
    %104 = vmatpush1.msra.mxu0 %v93
    %105 = vmatprep.subr.mxu0 0.0
    %106 = vmatpush1.msra.mxu0 %v92
    %107 = vmatprep.subr.mxu0 0.0
    %108 = vmatpush1.msra.mxu0 %v91
    %109 = vmatprep.subr.mxu0 0.0
    %110 = vmatpush1.msra.mxu0 %v90
    %111 = vmatprep.subr.mxu0 0.0
    %112 = vmatpush1.msra.mxu0 %v89
    %113 = vmatprep.subr.mxu0 0.0
    %114 = vmatpush1.msra.mxu0 %v88
    %115 = vmatprep.subr.mxu0 0.0
    %116 = vmatpush1.msra.mxu0 %v87
    %117 = vmatprep.subr.mxu0 0.0
    %118 = vmatpush1.msra.mxu0 %v86
    %119 = vmatprep.subr.mxu0 0.0
    %120 = vmatpush1.msra.mxu0 %v85
    %121 = vmatprep.subr.mxu0 0.0
    %122 = vmatpush1.msra.mxu0 %v84
    %123 = vmatprep.subr.mxu0 0.0
    %124 = vmatpush1.msra.mxu0 %v83
    %125 = vmatprep.subr.mxu0 0.0
    %126 = vmatpush1.msra.mxu0 %v82
    %127 = vmatprep.subr.mxu0 0.0
    %128 = vmatpush1.msra.mxu0 %v81
    %129 = vmatprep.subr.mxu0 0.0
    %130 = vmatpush2.msra.mxu0 0.0
    %131 = vmatprep.subr.mxu0 0.0
    %132 = vmatpush2.msra.mxu0 0.0
    %133 = vmatprep.subr.mxu0 0.0
    %134 = vmatpush2.msra.mxu0 0.0
    %135 = vmatprep.subr.mxu0 0.0
    %136 = vmatpush2.msra.mxu0 0.0
    %137 = vmatprep.subr.mxu0 0.0
    %138 = vmatpush2.msra.mxu0 0.0
    %139 = vmatprep.subr.mxu0 0.0
    %140 = vmatpush2.msra.mxu0 0.0
    %141 = vmatprep.subr.mxu0 0.0
    %142 = vmatpush2.msra.mxu0 0.0
    %143 = vmatprep.subr.mxu0 0.0
    %144 = vmatpush2.msra.mxu0 0.0
    %145 = vmatprep.subr.mxu0 0.0
    %146 = vmatpush2.msra.mxu0 0.0
    %147 = vmatprep.subr.mxu0 0.0
    %148 = vmatpush2.msra.mxu0 0.0
    %149 = vmatprep.subr.mxu0 0.0
    %150 = vmatpush2.msra.mxu0 0.0
    %151 = vmatprep.subr.mxu0 0.0
    %152 = vmatpush2.msra.mxu0 0.0
    %153 = vmatprep.subr.mxu0 0.0
    %154 = vmatpush2.msra.mxu0 0.0
    %155 = vmatprep.subr.mxu0 0.0
    %156 = vmatpush2.msra.mxu0 0.0
    %157 = vmatprep.subr.mxu0 0.0
    %158 = vmatpush2.msra.mxu0 0.0
    %159 = vmatprep.subr.mxu0 0.0
    %160 = vmatpush2.msra.mxu0 0.0
    %161 = vmatprep.mubr.f32.mxu0 0.0
    %162 = vmatmul.mubr.f32.gmra.mxu0 %v79
    %v163 = vpop.f32.mrf.mxu0
    %v164 = vadd.f32 0.0, %v163
    %v165 = vpop.f32.mrf.mxu0
    %166 = vmatprep.mubr.f32.mxu0 0.0
    %167 = vmatmul.mubr.f32.gmra.mxu0 %v80
    %v168 = vpop.f32.mrf.mxu0
    %v169 = vadd.f32 0.0, %v168
    %v170 = vpop.f32.mrf.mxu0
    %171 = vdwg.mxu0
    %v172 = vld [vmem:[#allocation5] sm:$0xff]
    %v173 = vld [vmem:[#allocation5 + $0x8] sm:$0xff]
    %v174 = vld [vmem:[#allocation5 + $0x10] sm:$0xff]
    %v175 = vld [vmem:[#allocation5 + $0x18] sm:$0xff]
    %v176 = vld [vmem:[#allocation5 + $0x20] sm:$0xff]
    %v177 = vld [vmem:[#allocation5 + $0x28] sm:$0xff]
    %v178 = vld [vmem:[#allocation5 + $0x30] sm:$0xff]
    %v179 = vld [vmem:[#allocation5 + $0x38] sm:$0xff]
    %v180 = vld [vmem:[#allocation5 + $0x40] sm:$0xff]
    %v181 = vld [vmem:[#allocation5 + $0x48] sm:$0xff]
    %v182 = vld [vmem:[#allocation5 + $0x50] sm:$0xff]
    %v183 = vld [vmem:[#allocation5 + $0x58] sm:$0xff]
    %v184 = vld [vmem:[#allocation5 + $0x60] sm:$0xff]
    %v185 = vld [vmem:[#allocation5 + $0x68] sm:$0xff]
    %v186 = vld [vmem:[#allocation5 + $0x70] sm:$0xff]
    %v187 = vld [vmem:[#allocation5 + $0x78] sm:$0xff]
    %v188 = vld [vmem:[%s6] sm:$0x1]
    %v189 = vlaneseq
    %v190 = vshrl.u32 %v189, 7
    %v191 = vsub.s32 0, %v190
    %v192 = vrot.slane %v188, %v191
    %193 = vmatprep.subr.mxu0 0.0
    %194 = vmatpush1.msra.mxu0 %v187
    %195 = vmatprep.subr.mxu0 0.0
    %196 = vmatpush1.msra.mxu0 %v186
    %197 = vmatprep.subr.mxu0 0.0
    %198 = vmatpush1.msra.mxu0 %v185
    %199 = vmatprep.subr.mxu0 0.0
    %200 = vmatpush1.msra.mxu0 %v184
    %201 = vmatprep.subr.mxu0 0.0
    %202 = vmatpush1.msra.mxu0 %v183
    %203 = vmatprep.subr.mxu0 0.0
    %204 = vmatpush1.msra.mxu0 %v182
    %205 = vmatprep.subr.mxu0 0.0
    %206 = vmatpush1.msra.mxu0 %v181
    %207 = vmatprep.subr.mxu0 0.0
    %208 = vmatpush1.msra.mxu0 %v180
    %209 = vmatprep.subr.mxu0 0.0
    %210 = vmatpush1.msra.mxu0 %v179
    %211 = vmatprep.subr.mxu0 0.0
    %212 = vmatpush1.msra.mxu0 %v178
    %213 = vmatprep.subr.mxu0 0.0
    %214 = vmatpush1.msra.mxu0 %v177
    %215 = vmatprep.subr.mxu0 0.0
    %216 = vmatpush1.msra.mxu0 %v176
    %217 = vmatprep.subr.mxu0 0.0
    %218 = vmatpush1.msra.mxu0 %v175
    %219 = vmatprep.subr.mxu0 0.0
    %220 = vmatpush1.msra.mxu0 %v174
    %221 = vmatprep.subr.mxu0 0.0
    %222 = vmatpush1.msra.mxu0 %v173
    %223 = vmatprep.subr.mxu0 0.0
    %224 = vmatpush1.msra.mxu0 %v172
    %225 = vmatprep.subr.mxu0 0.0
    %226 = vmatpush2.msra.mxu0 0.0
    %227 = vmatprep.subr.mxu0 0.0
    %228 = vmatpush2.msra.mxu0 0.0
    %229 = vmatprep.subr.mxu0 0.0
    %230 = vmatpush2.msra.mxu0 0.0
    %231 = vmatprep.subr.mxu0 0.0
    %232 = vmatpush2.msra.mxu0 0.0
    %233 = vmatprep.subr.mxu0 0.0
    %234 = vmatpush2.msra.mxu0 0.0
    %235 = vmatprep.subr.mxu0 0.0
    %236 = vmatpush2.msra.mxu0 0.0
    %237 = vmatprep.subr.mxu0 0.0
    %238 = vmatpush2.msra.mxu0 0.0
    %239 = vmatprep.subr.mxu0 0.0
    %240 = vmatpush2.msra.mxu0 0.0
    %241 = vmatprep.subr.mxu0 0.0
    %242 = vmatpush2.msra.mxu0 0.0
    %243 = vmatprep.subr.mxu0 0.0
    %244 = vmatpush2.msra.mxu0 0.0
    %245 = vmatprep.subr.mxu0 0.0
    %246 = vmatpush2.msra.mxu0 0.0
    %247 = vmatprep.subr.mxu0 0.0
    %248 = vmatpush2.msra.mxu0 0.0
    %249 = vmatprep.subr.mxu0 0.0
    %250 = vmatpush2.msra.mxu0 0.0
    %251 = vmatprep.subr.mxu0 0.0
    %252 = vmatpush2.msra.mxu0 0.0
    %253 = vmatprep.subr.mxu0 0.0
    %254 = vmatpush2.msra.mxu0 0.0
    %255 = vmatprep.subr.mxu0 0.0
    %256 = vmatpush2.msra.mxu0 0.0
    %257 = vmatprep.mubr.f32.mxu0 0.0
    %258 = vmatmul.mubr.f32.gmra.mxu0 %v164
    %v259 = vpop.f32.mrf.mxu0
    %v260 = vadd.f32 %v192, %v259
    %v261 = vpop.f32.mrf.mxu0
    %262 = vmatprep.mubr.f32.mxu0 0.0
    %263 = vmatmul.mubr.f32.gmra.mxu0 %v169
    %v264 = vpop.f32.mrf.mxu0
    %v265 = vadd.f32 %v192, %v264
    %v266 = vpop.f32.mrf.mxu0
    %267 = vdwg.mxu0
    %v268 = vmax.f32 %v260, 0.0
    %v269 = vmax.f32 %v265, 0.0
    %s270 = scalar_lea.vmem [#allocation5], 128
    %v271 = vld [vmem:[%s270] sm:$0xff]
    %v272 = vld [vmem:[%s270 + $0x8] sm:$0xff]
    %v273 = vld [vmem:[%s270 + $0x10] sm:$0xff]
    %v274 = vld [vmem:[%s270 + $0x18] sm:$0xff]
    %v275 = vld [vmem:[%s270 + $0x20] sm:$0xff]
    %v276 = vld [vmem:[%s270 + $0x28] sm:$0xff]
    %v277 = vld [vmem:[%s270 + $0x30] sm:$0xff]
    %v278 = vld [vmem:[%s270 + $0x38] sm:$0xff]
    %v279 = vld [vmem:[%s270 + $0x40] sm:$0xff]
    %v280 = vld [vmem:[%s270 + $0x48] sm:$0xff]
    %v281 = vld [vmem:[%s270 + $0x50] sm:$0xff]
    %v282 = vld [vmem:[%s270 + $0x58] sm:$0xff]
    %v283 = vld [vmem:[%s270 + $0x60] sm:$0xff]
    %v284 = vld [vmem:[%s270 + $0x68] sm:$0xff]
    %v285 = vld [vmem:[%s270 + $0x70] sm:$0xff]
    %v286 = vld [vmem:[%s270 + $0x78] sm:$0xff]
    %v287 = vld [vmem:[%s6 + $0x1] sm:$0x1]
    %v288 = vlaneseq
    %v289 = vshrl.u32 %v288, 7
    %v290 = vsub.s32 0, %v289
    %v291 = vrot.slane %v287, %v290
    %292 = vmatprep.subr.mxu0 0.0
    %293 = vmatpush1.msra.mxu0 %v286
    %294 = vmatprep.subr.mxu0 0.0
    %295 = vmatpush1.msra.mxu0 %v285
    %296 = vmatprep.subr.mxu0 0.0
    %297 = vmatpush1.msra.mxu0 %v284
    %298 = vmatprep.subr.mxu0 0.0
    %299 = vmatpush1.msra.mxu0 %v283
    %300 = vmatprep.subr.mxu0 0.0
    %301 = vmatpush1.msra.mxu0 %v282
    %302 = vmatprep.subr.mxu0 0.0
    %303 = vmatpush1.msra.mxu0 %v281
    %304 = vmatprep.subr.mxu0 0.0
    %305 = vmatpush1.msra.mxu0 %v280
    %306 = vmatprep.subr.mxu0 0.0
    %307 = vmatpush1.msra.mxu0 %v279
    %308 = vmatprep.subr.mxu0 0.0
    %309 = vmatpush1.msra.mxu0 %v278
    %310 = vmatprep.subr.mxu0 0.0
    %311 = vmatpush1.msra.mxu0 %v277
    %312 = vmatprep.subr.mxu0 0.0
    %313 = vmatpush1.msra.mxu0 %v276
    %314 = vmatprep.subr.mxu0 0.0
    %315 = vmatpush1.msra.mxu0 %v275
    %316 = vmatprep.subr.mxu0 0.0
    %317 = vmatpush1.msra.mxu0 %v274
    %318 = vmatprep.subr.mxu0 0.0
    %319 = vmatpush1.msra.mxu0 %v273
    %320 = vmatprep.subr.mxu0 0.0
    %321 = vmatpush1.msra.mxu0 %v272
    %322 = vmatprep.subr.mxu0 0.0
    %323 = vmatpush1.msra.mxu0 %v271
    %324 = vmatprep.subr.mxu0 0.0
    %325 = vmatpush2.msra.mxu0 0.0
    %326 = vmatprep.subr.mxu0 0.0
    %327 = vmatpush2.msra.mxu0 0.0
    %328 = vmatprep.subr.mxu0 0.0
    %329 = vmatpush2.msra.mxu0 0.0
    %330 = vmatprep.subr.mxu0 0.0
    %331 = vmatpush2.msra.mxu0 0.0
    %332 = vmatprep.subr.mxu0 0.0
    %333 = vmatpush2.msra.mxu0 0.0
    %334 = vmatprep.subr.mxu0 0.0
    %335 = vmatpush2.msra.mxu0 0.0
    %336 = vmatprep.subr.mxu0 0.0
    %337 = vmatpush2.msra.mxu0 0.0
    %338 = vmatprep.subr.mxu0 0.0
    %339 = vmatpush2.msra.mxu0 0.0
    %340 = vmatprep.subr.mxu0 0.0
    %341 = vmatpush2.msra.mxu0 0.0
    %342 = vmatprep.subr.mxu0 0.0
    %343 = vmatpush2.msra.mxu0 0.0
    %344 = vmatprep.subr.mxu0 0.0
    %345 = vmatpush2.msra.mxu0 0.0
    %346 = vmatprep.subr.mxu0 0.0
    %347 = vmatpush2.msra.mxu0 0.0
    %348 = vmatprep.subr.mxu0 0.0
    %349 = vmatpush2.msra.mxu0 0.0
    %350 = vmatprep.subr.mxu0 0.0
    %351 = vmatpush2.msra.mxu0 0.0
    %352 = vmatprep.subr.mxu0 0.0
    %353 = vmatpush2.msra.mxu0 0.0
    %354 = vmatprep.subr.mxu0 0.0
    %355 = vmatpush2.msra.mxu0 0.0
    %356 = vmatprep.mubr.f32.mxu0 0.0
    %357 = vmatmul.mubr.f32.gmra.mxu0 %v268
    %v358 = vpop.f32.mrf.mxu0
    %v359 = vadd.f32 %v291, %v358
    %v360 = vpop.f32.mrf.mxu0
    %361 = vmatprep.mubr.f32.mxu0 0.0
    %362 = vmatmul.mubr.f32.gmra.mxu0 %v269
    %v363 = vpop.f32.mrf.mxu0
    %v364 = vadd.f32 %v291, %v363
    %v365 = vpop.f32.mrf.mxu0
    %366 = vdwg.mxu0
    %v367 = vxor.u32 %v359, 2147483648
    %v368 = vxor.u32 %v364, 2147483648
    %v369 = vmul.f32 %v367, 1.442695
    %v370 = vpow.pop %v369
    %v371 = vmul.f32 %v368, 1.442695
    %v372 = vpow.pop %v371
    %v373 = vadd.f32 %v370, 1.0
    %v374 = vadd.f32 %v372, 1.0
    %v375 = vrcp.pop %v373
    %v376 = vmul.f32 1.0, %v375
    %v377 = vrcp.pop %v374
    %v378 = vmul.f32 1.0, %v377
    %v379 = vmul.f32 %v376, %v164
    %v380 = vmul.f32 %v378, %v169
    %v381 = vld [vmem:[%s3] sm:$0x3]
    %vm382 = vcmask 130048
    %v384 = vsel %vm382, %v381, 0
    %386 = vmatprep.subr.mxu0 0.0
    %387 = vmatpush1.msra.mxu0 0.0
    %388 = vmatprep.subr.mxu0 0.0
    %389 = vmatpush1.msra.mxu0 0.0
    %390 = vmatprep.subr.mxu0 0.0
    %391 = vmatpush1.msra.mxu0 0.0
    %392 = vmatprep.subr.mxu0 0.0
    %393 = vmatpush1.msra.mxu0 0.0
    %394 = vmatprep.subr.mxu0 0.0
    %395 = vmatpush1.msra.mxu0 0.0
    %396 = vmatprep.subr.mxu0 0.0
    %397 = vmatpush1.msra.mxu0 0.0
    %398 = vmatprep.subr.mxu0 0.0
    %399 = vmatpush1.msra.mxu0 0.0
    %400 = vmatprep.subr.mxu0 0.0
    %401 = vmatpush1.msra.mxu0 0.0
    %402 = vmatprep.subr.mxu0 0.0
    %403 = vmatpush1.msra.mxu0 0.0
    %404 = vmatprep.subr.mxu0 0.0
    %405 = vmatpush1.msra.mxu0 0.0
    %406 = vmatprep.subr.mxu0 0.0
    %407 = vmatpush1.msra.mxu0 0.0
    %408 = vmatprep.subr.mxu0 0.0
    %409 = vmatpush1.msra.mxu0 0.0
    %410 = vmatprep.subr.mxu0 0.0
    %411 = vmatpush1.msra.mxu0 0.0
    %412 = vmatprep.subr.mxu0 0.0
    %413 = vmatpush1.msra.mxu0 0.0
    %414 = vmatprep.subr.mxu0 0.0
    %415 = vmatpush1.msra.mxu0 %v380
    %416 = vmatprep.subr.mxu0 0.0
    %417 = vmatpush1.msra.mxu0 %v379
    %418 = vmatprep.subr.mxu0 0.0
    %419 = vmatpush2.msra.mxu0 0.0
    %420 = vmatprep.subr.mxu0 0.0
    %421 = vmatpush2.msra.mxu0 0.0
    %422 = vmatprep.subr.mxu0 0.0
    %423 = vmatpush2.msra.mxu0 0.0
    %424 = vmatprep.subr.mxu0 0.0
    %425 = vmatpush2.msra.mxu0 0.0
    %426 = vmatprep.subr.mxu0 0.0
    %427 = vmatpush2.msra.mxu0 0.0
    %428 = vmatprep.subr.mxu0 0.0
    %429 = vmatpush2.msra.mxu0 0.0
    %430 = vmatprep.subr.mxu0 0.0
    %431 = vmatpush2.msra.mxu0 0.0
    %432 = vmatprep.subr.mxu0 0.0
    %433 = vmatpush2.msra.mxu0 0.0
    %434 = vmatprep.subr.mxu0 0.0
    %435 = vmatpush2.msra.mxu0 0.0
    %436 = vmatprep.subr.mxu0 0.0
    %437 = vmatpush2.msra.mxu0 0.0
    %438 = vmatprep.subr.mxu0 0.0
    %439 = vmatpush2.msra.mxu0 0.0
    %440 = vmatprep.subr.mxu0 0.0
    %441 = vmatpush2.msra.mxu0 0.0
    %442 = vmatprep.subr.mxu0 0.0
    %443 = vmatpush2.msra.mxu0 0.0
    %444 = vmatprep.subr.mxu0 0.0
    %445 = vmatpush2.msra.mxu0 0.0
    %446 = vmatprep.subr.mxu0 0.0
    %447 = vmatpush2.msra.mxu0 0.0
    %448 = vmatprep.subr.mxu0 0.0
    %449 = vmatpush2.msra.mxu0 0.0
    %450 = vmatprep.mubr.f32.mxu0 0.0
    %451 = vmatmul.mubr.f32.gmra.mxu0 %v384
    %v452 = vpop.f32.mrf.mxu0
    %v453 = vadd.f32 0.0, %v452
    %v454 = vpop.f32.mrf.mxu0
    %455 = vdwg.mxu0
    %s456 = scalar_lea.vmem [#allocation5], 256
    %v457 = vld [vmem:[%s456] sm:$0xff]
    %v458 = vld [vmem:[%s456 + $0x8] sm:$0xff]
    %v459 = vld [vmem:[%s456 + $0x10] sm:$0xff]
    %v460 = vld [vmem:[%s456 + $0x18] sm:$0xff]
    %v461 = vld [vmem:[%s456 + $0x20] sm:$0xff]
    %v462 = vld [vmem:[%s456 + $0x28] sm:$0xff]
    %v463 = vld [vmem:[%s456 + $0x30] sm:$0xff]
    %v464 = vld [vmem:[%s456 + $0x38] sm:$0xff]
    %v465 = vld [vmem:[%s456 + $0x40] sm:$0xff]
    %v466 = vld [vmem:[%s456 + $0x48] sm:$0xff]
    %v467 = vld [vmem:[%s456 + $0x50] sm:$0xff]
    %v468 = vld [vmem:[%s456 + $0x58] sm:$0xff]
    %v469 = vld [vmem:[%s456 + $0x60] sm:$0xff]
    %v470 = vld [vmem:[%s456 + $0x68] sm:$0xff]
    %v471 = vld [vmem:[%s456 + $0x70] sm:$0xff]
    %v472 = vld [vmem:[%s456 + $0x78] sm:$0xff]
    %v473 = vld [vmem:[%s6 + $0x2] sm:$0x1]
    %v474 = vlaneseq
    %v475 = vshrl.u32 %v474, 7
    %v476 = vsub.s32 0, %v475
    %v477 = vrot.slane %v473, %v476
    %478 = vmatprep.subr.mxu0 0.0
    %479 = vmatpush1.msra.mxu0 %v472
    %480 = vmatprep.subr.mxu0 0.0
    %481 = vmatpush1.msra.mxu0 %v471
    %482 = vmatprep.subr.mxu0 0.0
    %483 = vmatpush1.msra.mxu0 %v470
    %484 = vmatprep.subr.mxu0 0.0
    %485 = vmatpush1.msra.mxu0 %v469
    %486 = vmatprep.subr.mxu0 0.0
    %487 = vmatpush1.msra.mxu0 %v468
    %488 = vmatprep.subr.mxu0 0.0
    %489 = vmatpush1.msra.mxu0 %v467
    %490 = vmatprep.subr.mxu0 0.0
    %491 = vmatpush1.msra.mxu0 %v466
    %492 = vmatprep.subr.mxu0 0.0
    %493 = vmatpush1.msra.mxu0 %v465
    %494 = vmatprep.subr.mxu0 0.0
    %495 = vmatpush1.msra.mxu0 %v464
    %496 = vmatprep.subr.mxu0 0.0
    %497 = vmatpush1.msra.mxu0 %v463
    %498 = vmatprep.subr.mxu0 0.0
    %499 = vmatpush1.msra.mxu0 %v462
    %500 = vmatprep.subr.mxu0 0.0
    %501 = vmatpush1.msra.mxu0 %v461
    %502 = vmatprep.subr.mxu0 0.0
    %503 = vmatpush1.msra.mxu0 %v460
    %504 = vmatprep.subr.mxu0 0.0
    %505 = vmatpush1.msra.mxu0 %v459
    %506 = vmatprep.subr.mxu0 0.0
    %507 = vmatpush1.msra.mxu0 %v458
    %508 = vmatprep.subr.mxu0 0.0
    %509 = vmatpush1.msra.mxu0 %v457
    %510 = vmatprep.subr.mxu0 0.0
    %511 = vmatpush2.msra.mxu0 0.0
    %512 = vmatprep.subr.mxu0 0.0
    %513 = vmatpush2.msra.mxu0 0.0
    %514 = vmatprep.subr.mxu0 0.0
    %515 = vmatpush2.msra.mxu0 0.0
    %516 = vmatprep.subr.mxu0 0.0
    %517 = vmatpush2.msra.mxu0 0.0
    %518 = vmatprep.subr.mxu0 0.0
    %519 = vmatpush2.msra.mxu0 0.0
    %520 = vmatprep.subr.mxu0 0.0
    %521 = vmatpush2.msra.mxu0 0.0
    %522 = vmatprep.subr.mxu0 0.0
    %523 = vmatpush2.msra.mxu0 0.0
    %524 = vmatprep.subr.mxu0 0.0
    %525 = vmatpush2.msra.mxu0 0.0
    %526 = vmatprep.subr.mxu0 0.0
    %527 = vmatpush2.msra.mxu0 0.0
    %528 = vmatprep.subr.mxu0 0.0
    %529 = vmatpush2.msra.mxu0 0.0
    %530 = vmatprep.subr.mxu0 0.0
    %531 = vmatpush2.msra.mxu0 0.0
    %532 = vmatprep.subr.mxu0 0.0
    %533 = vmatpush2.msra.mxu0 0.0
    %534 = vmatprep.subr.mxu0 0.0
    %535 = vmatpush2.msra.mxu0 0.0
    %536 = vmatprep.subr.mxu0 0.0
    %537 = vmatpush2.msra.mxu0 0.0
    %538 = vmatprep.subr.mxu0 0.0
    %539 = vmatpush2.msra.mxu0 0.0
    %540 = vmatprep.subr.mxu0 0.0
    %541 = vmatpush2.msra.mxu0 0.0
    %542 = vmatprep.mubr.f32.mxu0 0.0
    %543 = vmatmul.mubr.f32.gmra.mxu0 %v453
    %v544 = vpop.f32.mrf.mxu0
    %v545 = vadd.f32 %v477, %v544
    %v546 = vpop.f32.mrf.mxu0
    %547 = vdwg.mxu0
    %v548 = vmax.f32 %v545, 0.0
    %v549 = vld [vmem:[%s2] sm:$0x3]
    %s550 = scalar_lea.vmem [#allocation5], 384
    %v551 = vld [vmem:[%s550] sm:$0xff]
    %v552 = vld [vmem:[%s550 + $0x8] sm:$0xff]
    %v553 = vld [vmem:[%s550 + $0x10] sm:$0xff]
    %v554 = vld [vmem:[%s550 + $0x18] sm:$0xff]
    %v555 = vld [vmem:[%s550 + $0x20] sm:$0xff]
    %v556 = vld [vmem:[%s550 + $0x28] sm:$0xff]
    %v557 = vld [vmem:[%s550 + $0x30] sm:$0xff]
    %v558 = vld [vmem:[%s550 + $0x38] sm:$0xff]
    %v559 = vld [vmem:[%s550 + $0x40] sm:$0xff]
    %v560 = vld [vmem:[%s550 + $0x48] sm:$0xff]
    %v561 = vld [vmem:[%s550 + $0x50] sm:$0xff]
    %v562 = vld [vmem:[%s550 + $0x58] sm:$0xff]
    %v563 = vld [vmem:[%s550 + $0x60] sm:$0xff]
    %v564 = vld [vmem:[%s550 + $0x68] sm:$0xff]
    %v565 = vld [vmem:[%s550 + $0x70] sm:$0xff]
    %v566 = vld [vmem:[%s550 + $0x78] sm:$0xff]
    %v567 = vld [vmem:[%s6 + $0x3] sm:$0x1]
    %v568 = vlaneseq
    %v569 = vshrl.u32 %v568, 7
    %v570 = vsub.s32 0, %v569
    %v571 = vrot.slane %v567, %v570
    %572 = vmatprep.subr.mxu0 0.0
    %573 = vmatpush1.msra.mxu0 %v566
    %574 = vmatprep.subr.mxu0 0.0
    %575 = vmatpush1.msra.mxu0 %v565
    %576 = vmatprep.subr.mxu0 0.0
    %577 = vmatpush1.msra.mxu0 %v564
    %578 = vmatprep.subr.mxu0 0.0
    %579 = vmatpush1.msra.mxu0 %v563
    %580 = vmatprep.subr.mxu0 0.0
    %581 = vmatpush1.msra.mxu0 %v562
    %582 = vmatprep.subr.mxu0 0.0
    %583 = vmatpush1.msra.mxu0 %v561
    %584 = vmatprep.subr.mxu0 0.0
    %585 = vmatpush1.msra.mxu0 %v560
    %586 = vmatprep.subr.mxu0 0.0
    %587 = vmatpush1.msra.mxu0 %v559
    %588 = vmatprep.subr.mxu0 0.0
    %589 = vmatpush1.msra.mxu0 %v558
    %590 = vmatprep.subr.mxu0 0.0
    %591 = vmatpush1.msra.mxu0 %v557
    %592 = vmatprep.subr.mxu0 0.0
    %593 = vmatpush1.msra.mxu0 %v556
    %594 = vmatprep.subr.mxu0 0.0
    %595 = vmatpush1.msra.mxu0 %v555
    %596 = vmatprep.subr.mxu0 0.0
    %597 = vmatpush1.msra.mxu0 %v554
    %598 = vmatprep.subr.mxu0 0.0
    %599 = vmatpush1.msra.mxu0 %v553
    %600 = vmatprep.subr.mxu0 0.0
    %601 = vmatpush1.msra.mxu0 %v552
    %602 = vmatprep.subr.mxu0 0.0
    %603 = vmatpush1.msra.mxu0 %v551
    %604 = vmatprep.subr.mxu0 0.0
    %605 = vmatpush2.msra.mxu0 0.0
    %606 = vmatprep.subr.mxu0 0.0
    %607 = vmatpush2.msra.mxu0 0.0
    %608 = vmatprep.subr.mxu0 0.0
    %609 = vmatpush2.msra.mxu0 0.0
    %610 = vmatprep.subr.mxu0 0.0
    %611 = vmatpush2.msra.mxu0 0.0
    %612 = vmatprep.subr.mxu0 0.0
    %613 = vmatpush2.msra.mxu0 0.0
    %614 = vmatprep.subr.mxu0 0.0
    %615 = vmatpush2.msra.mxu0 0.0
    %616 = vmatprep.subr.mxu0 0.0
    %617 = vmatpush2.msra.mxu0 0.0
    %618 = vmatprep.subr.mxu0 0.0
    %619 = vmatpush2.msra.mxu0 0.0
    %620 = vmatprep.subr.mxu0 0.0
    %621 = vmatpush2.msra.mxu0 0.0
    %622 = vmatprep.subr.mxu0 0.0
    %623 = vmatpush2.msra.mxu0 0.0
    %624 = vmatprep.subr.mxu0 0.0
    %625 = vmatpush2.msra.mxu0 0.0
    %626 = vmatprep.subr.mxu0 0.0
    %627 = vmatpush2.msra.mxu0 0.0
    %628 = vmatprep.subr.mxu0 0.0
    %629 = vmatpush2.msra.mxu0 0.0
    %630 = vmatprep.subr.mxu0 0.0
    %631 = vmatpush2.msra.mxu0 0.0
    %632 = vmatprep.subr.mxu0 0.0
    %633 = vmatpush2.msra.mxu0 0.0
    %634 = vmatprep.subr.mxu0 0.0
    %635 = vmatpush2.msra.mxu0 0.0
    %636 = vmatprep.mubr.f32.mxu0 0.0
    %637 = vmatmul.mubr.f32.gmra.mxu0 %v549
    %v638 = vpop.f32.mrf.mxu0
    %v639 = vadd.f32 %v571, %v638
    %v640 = vpop.f32.mrf.mxu0
    %641 = vdwg.mxu0
    %v642 = vmax.f32 %v639, 0.0
    %s643 = scalar_lea.vmem [#allocation5], 512
    %v644 = vld [vmem:[%s643] sm:$0xff]
    %v645 = vld [vmem:[%s643 + $0x8] sm:$0xff]
    %v646 = vld [vmem:[%s643 + $0x10] sm:$0xff]
    %v647 = vld [vmem:[%s643 + $0x18] sm:$0xff]
    %v648 = vld [vmem:[%s643 + $0x20] sm:$0xff]
    %v649 = vld [vmem:[%s643 + $0x28] sm:$0xff]
    %v650 = vld [vmem:[%s643 + $0x30] sm:$0xff]
    %v651 = vld [vmem:[%s643 + $0x38] sm:$0xff]
    %v652 = vld [vmem:[%s643 + $0x40] sm:$0xff]
    %v653 = vld [vmem:[%s643 + $0x48] sm:$0xff]
    %v654 = vld [vmem:[%s643 + $0x50] sm:$0xff]
    %v655 = vld [vmem:[%s643 + $0x58] sm:$0xff]
    %v656 = vld [vmem:[%s643 + $0x60] sm:$0xff]
    %v657 = vld [vmem:[%s643 + $0x68] sm:$0xff]
    %v658 = vld [vmem:[%s643 + $0x70] sm:$0xff]
    %v659 = vld [vmem:[%s643 + $0x78] sm:$0xff]
    %v660 = vld [vmem:[%s6 + $0x4] sm:$0x1]
    %v661 = vlaneseq
    %v662 = vshrl.u32 %v661, 7
    %v663 = vsub.s32 0, %v662
    %v664 = vrot.slane %v660, %v663
    %665 = vmatprep.subr.mxu0 0.0
    %666 = vmatpush1.msra.mxu0 %v659
    %667 = vmatprep.subr.mxu0 0.0
    %668 = vmatpush1.msra.mxu0 %v658
    %669 = vmatprep.subr.mxu0 0.0
    %670 = vmatpush1.msra.mxu0 %v657
    %671 = vmatprep.subr.mxu0 0.0
    %672 = vmatpush1.msra.mxu0 %v656
    %673 = vmatprep.subr.mxu0 0.0
    %674 = vmatpush1.msra.mxu0 %v655
    %675 = vmatprep.subr.mxu0 0.0
    %676 = vmatpush1.msra.mxu0 %v654
    %677 = vmatprep.subr.mxu0 0.0
    %678 = vmatpush1.msra.mxu0 %v653
    %679 = vmatprep.subr.mxu0 0.0
    %680 = vmatpush1.msra.mxu0 %v652
    %681 = vmatprep.subr.mxu0 0.0
    %682 = vmatpush1.msra.mxu0 %v651
    %683 = vmatprep.subr.mxu0 0.0
    %684 = vmatpush1.msra.mxu0 %v650
    %685 = vmatprep.subr.mxu0 0.0
    %686 = vmatpush1.msra.mxu0 %v649
    %687 = vmatprep.subr.mxu0 0.0
    %688 = vmatpush1.msra.mxu0 %v648
    %689 = vmatprep.subr.mxu0 0.0
    %690 = vmatpush1.msra.mxu0 %v647
    %691 = vmatprep.subr.mxu0 0.0
    %692 = vmatpush1.msra.mxu0 %v646
    %693 = vmatprep.subr.mxu0 0.0
    %694 = vmatpush1.msra.mxu0 %v645
    %695 = vmatprep.subr.mxu0 0.0
    %696 = vmatpush1.msra.mxu0 %v644
    %697 = vmatprep.subr.mxu0 0.0
    %698 = vmatpush2.msra.mxu0 0.0
    %699 = vmatprep.subr.mxu0 0.0
    %700 = vmatpush2.msra.mxu0 0.0
    %701 = vmatprep.subr.mxu0 0.0
    %702 = vmatpush2.msra.mxu0 0.0
    %703 = vmatprep.subr.mxu0 0.0
    %704 = vmatpush2.msra.mxu0 0.0
    %705 = vmatprep.subr.mxu0 0.0
    %706 = vmatpush2.msra.mxu0 0.0
    %707 = vmatprep.subr.mxu0 0.0
    %708 = vmatpush2.msra.mxu0 0.0
    %709 = vmatprep.subr.mxu0 0.0
    %710 = vmatpush2.msra.mxu0 0.0
    %711 = vmatprep.subr.mxu0 0.0
    %712 = vmatpush2.msra.mxu0 0.0
    %713 = vmatprep.subr.mxu0 0.0
    %714 = vmatpush2.msra.mxu0 0.0
    %715 = vmatprep.subr.mxu0 0.0
    %716 = vmatpush2.msra.mxu0 0.0
    %717 = vmatprep.subr.mxu0 0.0
    %718 = vmatpush2.msra.mxu0 0.0
    %719 = vmatprep.subr.mxu0 0.0
    %720 = vmatpush2.msra.mxu0 0.0
    %721 = vmatprep.subr.mxu0 0.0
    %722 = vmatpush2.msra.mxu0 0.0
    %723 = vmatprep.subr.mxu0 0.0
    %724 = vmatpush2.msra.mxu0 0.0
    %725 = vmatprep.subr.mxu0 0.0
    %726 = vmatpush2.msra.mxu0 0.0
    %727 = vmatprep.subr.mxu0 0.0
    %728 = vmatpush2.msra.mxu0 0.0
    %729 = vmatprep.mubr.f32.mxu0 0.0
    %730 = vmatmul.mubr.f32.gmra.mxu0 %v642
    %v731 = vpop.f32.mrf.mxu0
    %v732 = vadd.f32 %v664, %v731
    %v733 = vpop.f32.mrf.mxu0
    %734 = vdwg.mxu0
    %v735 = vmax.f32 %v732, 0.0
    %s736 = scalar_lea.vmem [#allocation5], 640
    %v737 = vld [vmem:[%s736] sm:$0xff]
    %v738 = vld [vmem:[%s736 + $0x8] sm:$0xff]
    %v739 = vld [vmem:[%s736 + $0x10] sm:$0xff]
    %v740 = vld [vmem:[%s736 + $0x18] sm:$0xff]
    %v741 = vld [vmem:[%s736 + $0x20] sm:$0xff]
    %v742 = vld [vmem:[%s736 + $0x28] sm:$0xff]
    %v743 = vld [vmem:[%s736 + $0x30] sm:$0xff]
    %v744 = vld [vmem:[%s736 + $0x38] sm:$0xff]
    %v745 = vld [vmem:[%s736 + $0x40] sm:$0xff]
    %v746 = vld [vmem:[%s736 + $0x48] sm:$0xff]
    %v747 = vld [vmem:[%s736 + $0x50] sm:$0xff]
    %v748 = vld [vmem:[%s736 + $0x58] sm:$0xff]
    %v749 = vld [vmem:[%s736 + $0x60] sm:$0xff]
    %v750 = vld [vmem:[%s736 + $0x68] sm:$0xff]
    %v751 = vld [vmem:[%s736 + $0x70] sm:$0xff]
    %v752 = vld [vmem:[%s736 + $0x78] sm:$0xff]
    %v753 = vld [vmem:[%s6 + $0x5] sm:$0x1]
    %v754 = vlaneseq
    %v755 = vshrl.u32 %v754, 7
    %v756 = vsub.s32 0, %v755
    %v757 = vrot.slane %v753, %v756
    %758 = vmatprep.subr.mxu0 0.0
    %759 = vmatpush1.msra.mxu0 %v752
    %760 = vmatprep.subr.mxu0 0.0
    %761 = vmatpush1.msra.mxu0 %v751
    %762 = vmatprep.subr.mxu0 0.0
    %763 = vmatpush1.msra.mxu0 %v750
    %764 = vmatprep.subr.mxu0 0.0
    %765 = vmatpush1.msra.mxu0 %v749
    %766 = vmatprep.subr.mxu0 0.0
    %767 = vmatpush1.msra.mxu0 %v748
    %768 = vmatprep.subr.mxu0 0.0
    %769 = vmatpush1.msra.mxu0 %v747
    %770 = vmatprep.subr.mxu0 0.0
    %771 = vmatpush1.msra.mxu0 %v746
    %772 = vmatprep.subr.mxu0 0.0
    %773 = vmatpush1.msra.mxu0 %v745
    %774 = vmatprep.subr.mxu0 0.0
    %775 = vmatpush1.msra.mxu0 %v744
    %776 = vmatprep.subr.mxu0 0.0
    %777 = vmatpush1.msra.mxu0 %v743
    %778 = vmatprep.subr.mxu0 0.0
    %779 = vmatpush1.msra.mxu0 %v742
    %780 = vmatprep.subr.mxu0 0.0
    %781 = vmatpush1.msra.mxu0 %v741
    %782 = vmatprep.subr.mxu0 0.0
    %783 = vmatpush1.msra.mxu0 %v740
    %784 = vmatprep.subr.mxu0 0.0
    %785 = vmatpush1.msra.mxu0 %v739
    %786 = vmatprep.subr.mxu0 0.0
    %787 = vmatpush1.msra.mxu0 %v738
    %788 = vmatprep.subr.mxu0 0.0
    %789 = vmatpush1.msra.mxu0 %v737
    %790 = vmatprep.subr.mxu0 0.0
    %791 = vmatpush2.msra.mxu0 0.0
    %792 = vmatprep.subr.mxu0 0.0
    %793 = vmatpush2.msra.mxu0 0.0
    %794 = vmatprep.subr.mxu0 0.0
    %795 = vmatpush2.msra.mxu0 0.0
    %796 = vmatprep.subr.mxu0 0.0
    %797 = vmatpush2.msra.mxu0 0.0
    %798 = vmatprep.subr.mxu0 0.0
    %799 = vmatpush2.msra.mxu0 0.0
    %800 = vmatprep.subr.mxu0 0.0
    %801 = vmatpush2.msra.mxu0 0.0
    %802 = vmatprep.subr.mxu0 0.0
    %803 = vmatpush2.msra.mxu0 0.0
    %804 = vmatprep.subr.mxu0 0.0
    %805 = vmatpush2.msra.mxu0 0.0
    %806 = vmatprep.subr.mxu0 0.0
    %807 = vmatpush2.msra.mxu0 0.0
    %808 = vmatprep.subr.mxu0 0.0
    %809 = vmatpush2.msra.mxu0 0.0
    %810 = vmatprep.subr.mxu0 0.0
    %811 = vmatpush2.msra.mxu0 0.0
    %812 = vmatprep.subr.mxu0 0.0
    %813 = vmatpush2.msra.mxu0 0.0
    %814 = vmatprep.subr.mxu0 0.0
    %815 = vmatpush2.msra.mxu0 0.0
    %816 = vmatprep.subr.mxu0 0.0
    %817 = vmatpush2.msra.mxu0 0.0
    %818 = vmatprep.subr.mxu0 0.0
    %819 = vmatpush2.msra.mxu0 0.0
    %820 = vmatprep.subr.mxu0 0.0
    %821 = vmatpush2.msra.mxu0 0.0
    %822 = vmatprep.mubr.f32.mxu0 0.0
    %823 = vmatmul.mubr.f32.gmra.mxu0 %v735
    %v824 = vpop.f32.mrf.mxu0
    %v825 = vadd.f32 %v757, %v824
    %v826 = vpop.f32.mrf.mxu0
    %827 = vdwg.mxu0
    %v828 = vmax.f32 %v825, 0.0
    %s829 = scalar_lea.vmem [#allocation5], 768
    %v830 = vld [vmem:[%s829] sm:$0xff]
    %v831 = vld [vmem:[%s829 + $0x8] sm:$0xff]
    %v832 = vld [vmem:[%s829 + $0x10] sm:$0xff]
    %v833 = vld [vmem:[%s829 + $0x18] sm:$0xff]
    %v834 = vld [vmem:[%s829 + $0x20] sm:$0xff]
    %v835 = vld [vmem:[%s829 + $0x28] sm:$0xff]
    %v836 = vld [vmem:[%s829 + $0x30] sm:$0xff]
    %v837 = vld [vmem:[%s829 + $0x38] sm:$0xff]
    %v838 = vld [vmem:[%s829 + $0x40] sm:$0xff]
    %v839 = vld [vmem:[%s829 + $0x48] sm:$0xff]
    %v840 = vld [vmem:[%s829 + $0x50] sm:$0xff]
    %v841 = vld [vmem:[%s829 + $0x58] sm:$0xff]
    %v842 = vld [vmem:[%s829 + $0x60] sm:$0xff]
    %v843 = vld [vmem:[%s829 + $0x68] sm:$0xff]
    %v844 = vld [vmem:[%s829 + $0x70] sm:$0xff]
    %v845 = vld [vmem:[%s829 + $0x78] sm:$0xff]
    %v846 = vld [vmem:[%s6 + $0x6] sm:$0x1]
    %v847 = vlaneseq
    %v848 = vshrl.u32 %v847, 7
    %v849 = vsub.s32 0, %v848
    %v850 = vrot.slane %v846, %v849
    %851 = vmatprep.subr.mxu0 0.0
    %852 = vmatpush1.msra.mxu0 %v845
    %853 = vmatprep.subr.mxu0 0.0
    %854 = vmatpush1.msra.mxu0 %v844
    %855 = vmatprep.subr.mxu0 0.0
    %856 = vmatpush1.msra.mxu0 %v843
    %857 = vmatprep.subr.mxu0 0.0
    %858 = vmatpush1.msra.mxu0 %v842
    %859 = vmatprep.subr.mxu0 0.0
    %860 = vmatpush1.msra.mxu0 %v841
    %861 = vmatprep.subr.mxu0 0.0
    %862 = vmatpush1.msra.mxu0 %v840
    %863 = vmatprep.subr.mxu0 0.0
    %864 = vmatpush1.msra.mxu0 %v839
    %865 = vmatprep.subr.mxu0 0.0
    %866 = vmatpush1.msra.mxu0 %v838
    %867 = vmatprep.subr.mxu0 0.0
    %868 = vmatpush1.msra.mxu0 %v837
    %869 = vmatprep.subr.mxu0 0.0
    %870 = vmatpush1.msra.mxu0 %v836
    %871 = vmatprep.subr.mxu0 0.0
    %872 = vmatpush1.msra.mxu0 %v835
    %873 = vmatprep.subr.mxu0 0.0
    %874 = vmatpush1.msra.mxu0 %v834
    %875 = vmatprep.subr.mxu0 0.0
    %876 = vmatpush1.msra.mxu0 %v833
    %877 = vmatprep.subr.mxu0 0.0
    %878 = vmatpush1.msra.mxu0 %v832
    %879 = vmatprep.subr.mxu0 0.0
    %880 = vmatpush1.msra.mxu0 %v831
    %881 = vmatprep.subr.mxu0 0.0
    %882 = vmatpush1.msra.mxu0 %v830
    %883 = vmatprep.subr.mxu0 0.0
    %884 = vmatpush2.msra.mxu0 0.0
    %885 = vmatprep.subr.mxu0 0.0
    %886 = vmatpush2.msra.mxu0 0.0
    %887 = vmatprep.subr.mxu0 0.0
    %888 = vmatpush2.msra.mxu0 0.0
    %889 = vmatprep.subr.mxu0 0.0
    %890 = vmatpush2.msra.mxu0 0.0
    %891 = vmatprep.subr.mxu0 0.0
    %892 = vmatpush2.msra.mxu0 0.0
    %893 = vmatprep.subr.mxu0 0.0
    %894 = vmatpush2.msra.mxu0 0.0
    %895 = vmatprep.subr.mxu0 0.0
    %896 = vmatpush2.msra.mxu0 0.0
    %897 = vmatprep.subr.mxu0 0.0
    %898 = vmatpush2.msra.mxu0 0.0
    %899 = vmatprep.subr.mxu0 0.0
    %900 = vmatpush2.msra.mxu0 0.0
    %901 = vmatprep.subr.mxu0 0.0
    %902 = vmatpush2.msra.mxu0 0.0
    %903 = vmatprep.subr.mxu0 0.0
    %904 = vmatpush2.msra.mxu0 0.0
    %905 = vmatprep.subr.mxu0 0.0
    %906 = vmatpush2.msra.mxu0 0.0
    %907 = vmatprep.subr.mxu0 0.0
    %908 = vmatpush2.msra.mxu0 0.0
    %909 = vmatprep.subr.mxu0 0.0
    %910 = vmatpush2.msra.mxu0 0.0
    %911 = vmatprep.subr.mxu0 0.0
    %912 = vmatpush2.msra.mxu0 0.0
    %913 = vmatprep.subr.mxu0 0.0
    %914 = vmatpush2.msra.mxu0 0.0
    %915 = vmatprep.mubr.f32.mxu0 0.0
    %916 = vmatmul.mubr.f32.gmra.mxu0 %v828
    %v917 = vpop.f32.mrf.mxu0
    %v918 = vadd.f32 %v850, %v917
    %v919 = vpop.f32.mrf.mxu0
    %920 = vdwg.mxu0
    %v921 = vxor.u32 %v918, 2147483648
    %v922 = vmul.f32 %v921, 1.442695
    %v923 = vpow.pop %v922
    %v924 = vadd.f32 %v923, 1.0
    %v925 = vrcp.pop %v924
    %v926 = vmul.f32 1.0, %v925
    %927 = vst [vmem:[#allocation7] sm:$0x3] %v548
    %928 = vst [vmem:[#allocation7 + $0x2] sm:$0x3] %v735
    %929 = vst [vmem:[#allocation7 + $0x4] sm:$0x3] %v926
    // Predicated region
    $region38: #{tpu_custom_call.1} parent=1 // pred_check
      _
    $region39: #{tpu_custom_call.1} parent=1 // pred_check_branch
      %931 = sbr.rel (0) target = $region41
    $region40: #{tpu_custom_call.1} parent=1 // pred_region
      %s933 = ssub.s32 96, 96
      %934 = vsyncadd [#allocation4], %s933
      %s936 = sshll.u32 [#allocation7], 4
      %s937 = int_to_ptr.vmem [resolvable:$true] %s936
      %939 = dma.vmem_to_hbm [thread:$0]  %s937, 96, %s7, [#allocation4]
    $region41: #{tpu_custom_call.1} parent=1 // pred_fallthru
      _
    // Predicated region
    $region42: #{tpu_custom_call.1} parent=1 // pred_check
      _
    $region43: #{tpu_custom_call.1} parent=1 // pred_check_branch
      %941 = sbr.rel (0) target = $region45
    $region44: #{tpu_custom_call.1} parent=1 // pred_region
      %942 = dma.done [#allocation4], 96
    $region45: #{tpu_custom_call.1} parent=1 // pred_fallthru
      _
    %943 = vsyncpa [#allocation3], 1
    %944 = vsyncpa [#allocation6], 1
    %945 = vsyncpa [#allocation4], 1

</llo_original>
